<compile_context>
chip_gen: v7x
topology: tpu7x:2x2x1
jax: 0.10.0
libtpu: 0.0.40
codegen_flags: <defaults>
</compile_context>

<pallas_src>
import jax
import jax.numpy as jnp
from jax import lax
from jax.experimental import pallas as pl
from jax.experimental.pallas import tpu as pltpu

BN_EPS = 1e-5
HIDDEN = 100
HIDDEN_PAD = 128                   # 100 -> 128: lane/MXU friendly
IN_BEAM = 8
IN_CTRL = 2
ONES_COL = IN_BEAM + IN_CTRL       # column of x that carries a constant 1 (bias feed)
IN_FEATS = IN_BEAM + IN_CTRL + 1   # 11 real rows of the packed input
IN_PAD = 16                        # padded contraction dim for the input GEMM
ONES_ROW = HIDDEN                  # activation row that carries a constant 1
OUT_DIM = 6
OUT_PAD = 8                        # pad output feature rows 6 -> 8

MAX_TILE_B = 8192                  # default batch tile; v5e/v6e can pass 16384
MEGACORE_SPLIT_MIN_B = 1024        # split into >=2 tiles (both v7x TCs) above this


def _cdiv(a, b):
    return -(-a // b)


def _round_up(x, m):
    return _cdiv(x, m) * m


def _mlp_kernel(x_ref, w_in_ref, w_h1_ref, w_h2_ref, w_out_ref, b_out_ref, o_ref):
    """Activations are (features, batch_tile): batch on lanes => lane-dense.

    Input/hidden biases are folded into the GEMMs (constant-1 input row + ones
    activation row), so each layer is one MXU dot + a bf16 ReLU. The output
    layer keeps an explicit f32 bias add.
    """
    # ---- input layer: Linear(10,100)+bias+ReLU (bias in column ONES_COL) ----
    z = jnp.dot(w_in_ref[...], x_ref[...], preferred_element_type=jnp.float32)
    h = jnp.maximum(z.astype(jnp.bfloat16), 0.0)

    # ---- hidden block 1: Linear(no bias)+BN+ReLU, BN+bias folded into weight ----
    z = jnp.dot(w_h1_ref[...], h, preferred_element_type=jnp.float32)
    h = jnp.maximum(z.astype(jnp.bfloat16), 0.0)

    # ---- hidden block 2 ----
    z = jnp.dot(w_h2_ref[...], h, preferred_element_type=jnp.float32)
    h = jnp.maximum(z.astype(jnp.bfloat16), 0.0)

    # ---- output layer: Linear(100,6) + f32 bias (feature rows padded 6 -> 8) ----
    o_ref[...] = (jnp.dot(w_out_ref[...], h, preferred_element_type=jnp.float32)
                  + b_out_ref[...])


def fold_and_pack_params(p):
    """Fold eval-mode BN and all non-output biases into the weights (in f32),
    pad feature dims to MXU/vreg-friendly sizes, cast weights to bf16.

    Bias-in-GEMM layout:
      * input weight (128, 16): cols 0-9 = W_in, col 10 = b_in, W[100, 10] = 1
        (so activation row 100 == 1 after ReLU, given x row 10 == 1).
      * hidden weight (128, 128): [0:100,0:100] = BN-folded W, col 100 = folded
        bias, W[100,100] = 1 (propagates the ones row).
      * output weight (8, 128): rows 0-5 = W_out; output bias stays a separate
        f32 (8,1) column (added in-kernel for accuracy).
    """
    f32, bf16 = jnp.float32, jnp.bfloat16
    packed = {}

    # input layer
    w_in = jnp.zeros((HIDDEN_PAD, IN_PAD), f32)
    w_in = w_in.at[:HIDDEN, :IN_BEAM + IN_CTRL].set(jnp.asarray(p["w_in"], f32))
    w_in = w_in.at[:HIDDEN, ONES_COL].set(jnp.asarray(p["b_in"], f32))
    w_in = w_in.at[ONES_ROW, ONES_COL].set(1.0)
    packed["w_in"] = w_in.astype(bf16)                                # (128, 16)

    # hidden blocks: fold BN (eval mode) in f32, stash bias in column ONES_ROW.
    for i in (1, 2):
        scale = (jnp.asarray(p[f"g{i}"], f32)
                 * lax.rsqrt(jnp.asarray(p[f"v{i}"], f32) + BN_EPS))  # (100,)
        w_fold = jnp.asarray(p[f"w_h{i}"], f32) * scale[:, None]      # (100,100)
        b_fold = (jnp.asarray(p[f"be{i}"], f32)
                  - jnp.asarray(p[f"m{i}"], f32) * scale)             # (100,)
        w = jnp.zeros((HIDDEN_PAD, HIDDEN_PAD), f32)
        w = w.at[:HIDDEN, :HIDDEN].set(w_fold)
        w = w.at[:HIDDEN, ONES_ROW].set(b_fold)
        w = w.at[ONES_ROW, ONES_ROW].set(1.0)
        packed[f"w_h{i}"] = w.astype(bf16)                            # (128, 128)

    # output layer (explicit f32 bias kept separate)
    w_out = jnp.zeros((OUT_PAD, HIDDEN_PAD), f32)
    w_out = w_out.at[:OUT_DIM, :HIDDEN].set(jnp.asarray(p["w_out"], f32))
    packed["w_out"] = w_out.astype(bf16)                              # (8, 128)
    b_out = jnp.zeros((OUT_PAD, 1), f32)
    packed["b_out"] = b_out.at[:OUT_DIM, 0].set(jnp.asarray(p["b_out"], f32))
    return packed


def space_charge_quadrupole_mlp(incoming, controls, packed, *, max_tile_b=MAX_TILE_B):
    """incoming: (B, 8) f32, controls: (B, 2) f32 -> (B, 6) f32.

    max_tile_b: batch tile (multiple of 128). 8192 default (fits the 32 MiB
    scoped-VMEM default on every generation); v5e/v6e can pass 16384.
    """
    assert max_tile_b % 128 == 0
    B = incoming.shape[0]

    # Balanced tiling: no tile is mostly padding, and large batches are split
    # into >=2 tiles so the "parallel" axis uses both v7x TensorCores.
    b128 = _round_up(B, 128)
    num_tiles = _cdiv(b128, max_tile_b)
    if num_tiles == 1 and b128 >= MEGACORE_SPLIT_MIN_B:
        num_tiles = 2
    tile_b = _round_up(_cdiv(B, num_tiles), 128)
    b_pad = num_tiles * tile_b

    # Layout plumbing: single concat+cast+transpose+pad; batch goes on lanes.
    # Row layout: [0:8) beam, [8:10) controls, 10 = constant 1 (bias feed), rest 0.
    ones = jnp.ones((B, 1), incoming.dtype)
    x = jnp.concatenate([incoming, controls, ones], axis=1)          # (B, 11)
    x = jnp.pad(x.astype(jnp.bfloat16).T,
                ((0, IN_PAD - IN_FEATS), (0, b_pad - B)))            # (16, b_pad)

    weights = (packed["w_in"], packed["w_h1"], packed["w_h2"],
               packed["w_out"], packed["b_out"])

    def resident_spec(arr):
        # Constant block index: fetched once, stays resident in VMEM.
        return pl.BlockSpec(arr.shape, lambda i: (0, 0))

    # Only raise the scoped-VMEM limit for the oversized v5e/v6e tiles.
    vmem_limit = None if tile_b <= 8192 else 100 * 1024 * 1024

    out_pad = pl.pallas_call(
        _mlp_kernel,
        out_shape=jax.ShapeDtypeStruct((OUT_PAD, b_pad), jnp.float32),
        grid=(num_tiles,),
        in_specs=[pl.BlockSpec((IN_PAD, tile_b), lambda i: (0, i))]
                 + [resident_spec(w) for w in weights],
        out_specs=pl.BlockSpec((OUT_PAD, tile_b), lambda i: (0, i)),
        compiler_params=pltpu.CompilerParams(
            dimension_semantics=("parallel",),
            vmem_limit_bytes=vmem_limit),
    )(x, *weights)

    return out_pad[:OUT_DIM, :B].T


# ----------------------------- test helpers ---------------------------------

def _init_params(key, hidden=HIDDEN):
    """Deterministic synthetic parameters (PyTorch layout, PyTorch-like init)."""
    def uniform(k, shape, fan_in):
        bound = 1.0 / jnp.sqrt(jnp.float32(fan_in))
        return jax.random.uniform(k, shape, jnp.float32, -bound, bound)

    ks = jax.random.split(key, 14)
    p = {}
    p["w_in"] = uniform(ks[0], (hidden, IN_BEAM + IN_CTRL), 10)   # (out, in)
    p["b_in"] = uniform(ks[1], (hidden,), 10)
    for base, i in ((2, 1), (7, 2)):
        p[f"w_h{i}"] = uniform(ks[base], (hidden, hidden), hidden)
        p[f"g{i}"] = 1.0 + 0.1 * jax.random.normal(ks[base + 1], (hidden,), jnp.float32)
        p[f"be{i}"] = 0.1 * jax.random.normal(ks[base + 2], (hidden,), jnp.float32)
        p[f"m{i}"] = 0.05 * jax.random.normal(ks[base + 3], (hidden,), jnp.float32)
        p[f"v{i}"] = 1.0 + 0.1 * jax.random.uniform(ks[base + 4], (hidden,), jnp.float32)
    p["w_out"] = uniform(ks[12], (OUT_DIM, hidden), hidden)
    p["b_out"] = uniform(ks[13], (OUT_DIM,), hidden)
    return p


def _reference_f32(incoming, controls, p):
    """Pure-JAX f32 reference matching the PyTorch forward (eval-mode BN)."""
    x = jnp.concatenate([incoming, controls], axis=1).astype(jnp.float32)
    h = jnp.maximum(x @ p["w_in"].T + p["b_in"], 0.0)
    for i in (1, 2):
        z = h @ p[f"w_h{i}"].T
        scale = p[f"g{i}"] / jnp.sqrt(p[f"v{i}"] + BN_EPS)
        z = (z - p[f"m{i}"]) * scale + p[f"be{i}"]
        h = jnp.maximum(z, 0.0)
    return h @ p["w_out"].T + p["b_out"]


def _reference_kernel_precision(incoming, controls, p):
    """Reference with the kernel's precision: bf16 GEMM operands, f32 accum,
    BN folded in f32, bf16 input/hidden biases (folded into GEMM), f32 out bias."""
    bf, f32 = jnp.bfloat16, jnp.float32

    def mmT(x, w):   # (B, in) x (out, in)^T -> (B, out), bf16 operands, f32 acc
        return lax.dot_general(x.astype(bf), jnp.asarray(w, f32).astype(bf),
                               (((1,), (1,)), ((), ())),
                               preferred_element_type=f32)

    def bfb(v):      # biases travel through the bf16 weights in the kernel
        return jnp.asarray(v, f32).astype(bf).astype(f32)

    x = jnp.concatenate([incoming, controls], axis=1).astype(f32)
    h = jnp.maximum(mmT(x, p["w_in"]) + bfb(p["b_in"]), 0.0)
    for i in (1, 2):
        scale = p[f"g{i}"] * lax.rsqrt(p[f"v{i}"] + BN_EPS)
        w_fold = p[f"w_h{i}"] * scale[:, None]
        b_fold = p[f"be{i}"] - p[f"m{i}"] * scale
        h = jnp.maximum(mmT(h, w_fold) + bfb(b_fold), 0.0)
    return mmT(h, p["w_out"]) + p["b_out"]


if __name__ == "__main__":
    key = jax.random.PRNGKey(0)
    k_params, k_in, k_ctrl = jax.random.split(key, 3)

    params = _init_params(k_params)
    packed = fold_and_pack_params(params)

    # --- small smoke test (single grid step) ---
    B = 8
    incoming = jax.random.normal(k_in, (B, IN_BEAM), jnp.float32)
    controls = jax.random.normal(k_ctrl, (B, IN_CTRL), jnp.float32)

    out = jax.block_until_ready(space_charge_quadrupole_mlp(incoming, controls, packed))
    assert out.shape == (B, OUT_DIM)

    ref_k = _reference_kernel_precision(incoming, controls, params)
    ref_f32 = _reference_f32(incoming, controls, params)
    assert jnp.allclose(out, ref_k, atol=2e-3, rtol=2e-3), "mismatch vs kernel-precision ref"
    assert jnp.allclose(out, ref_f32, atol=3e-2, rtol=3e-2), "mismatch vs f32 module ref"

    # --- ragged batch, multi-step grid (forces balanced tiling + pipelining) ---
    B2 = 300
    inc2 = jax.random.normal(jax.random.PRNGKey(1), (B2, IN_BEAM), jnp.float32)
    ctl2 = jax.random.normal(jax.random.PRNGKey(2), (B2, IN_CTRL), jnp.float32)
    out2 = jax.block_until_ready(
        space_charge_quadrupole_mlp(inc2, ctl2, packed, max_tile_b=128))
    assert out2.shape == (B2, OUT_DIM)
    ref2 = _reference_kernel_precision(inc2, ctl2, params)
    assert jnp.allclose(out2, ref2, atol=2e-3, rtol=2e-3), "mismatch (multi-tile grid)"

    # --- larger batch: exercises the >=2-tile megacore split + balanced tiles ---
    B3 = 2100
    k3a, k3b = jax.random.split(jax.random.PRNGKey(3))
    inc3 = jax.random.normal(k3a, (B3, IN_BEAM), jnp.float32)
    ctl3 = jax.random.normal(k3b, (B3, IN_CTRL), jnp.float32)
    out3 = jax.block_until_ready(space_charge_quadrupole_mlp(inc3, ctl3, packed))
    assert out3.shape == (B3, OUT_DIM)
    ref3 = _reference_kernel_precision(inc3, ctl3, params)
    assert jnp.allclose(out3, ref3, atol=2e-3, rtol=2e-3), "mismatch (megacore split)"

    print("KERNEL_OK")
</pallas_src>

<mosaic_0001>
module attributes {stable_mosaic.version = 11 : i64} {
  func.func @_mlp_kernel(%arg0: i32, %arg1: memref<16x128xbf16, #tpu.memory_space<vmem>>, %arg2: memref<128x16xbf16, #tpu.memory_space<vmem>>, %arg3: memref<128x128xbf16, #tpu.memory_space<vmem>>, %arg4: memref<128x128xbf16, #tpu.memory_space<vmem>>, %arg5: memref<8x128xbf16, #tpu.memory_space<vmem>>, %arg6: memref<8x1xf32, #tpu.memory_space<vmem>>, %arg7: memref<8x128xf32, #tpu.memory_space<vmem>>) attributes {dimension_semantics = [#tpu.dimension_semantics<parallel>], iteration_bounds = array<i64: 1>, scalar_prefetch = 0 : i64, scratch_operands = 0 : i64, tpu.core_type = #tpu.core_type<tc>, window_params = [{transform_indices = @transform_0, window_bounds = array<i64: 16, 128>}, {pipeline_mode = #tpu.pipeline_mode<synchronous>, transform_indices = @transform_1, window_bounds = array<i64: 128, 16>}, {pipeline_mode = #tpu.pipeline_mode<synchronous>, transform_indices = @transform_2, window_bounds = array<i64: 128, 128>}, {pipeline_mode = #tpu.pipeline_mode<synchronous>, transform_indices = @transform_3, window_bounds = array<i64: 128, 128>}, {pipeline_mode = #tpu.pipeline_mode<synchronous>, transform_indices = @transform_4, window_bounds = array<i64: 8, 128>}, {pipeline_mode = #tpu.pipeline_mode<synchronous>, transform_indices = @transform_5, window_bounds = array<i64: 8, 1>}, {transform_indices = @transform_6, window_bounds = array<i64: 8, 128>}]} {
    %c0 = arith.constant 0 : index
    %c0_0 = arith.constant 0 : index
    %0 = vector.load %arg2[%c0, %c0_0] : memref<128x16xbf16, #tpu.memory_space<vmem>>, vector<128x16xbf16>
    %c0_1 = arith.constant 0 : index
    %c0_2 = arith.constant 0 : index
    %1 = vector.load %arg1[%c0_1, %c0_2] : memref<16x128xbf16, #tpu.memory_space<vmem>>, vector<16x128xbf16>
    %cst = arith.constant dense<0.000000e+00> : vector<128x128xf32>
    %2 = tpu.matmul %0, %1, %cst {dimension_numbers = #tpu.dot_dimension_numbers<[1], [0], [0], [1], [0, 0, 1, 1], [], []>} : vector<128x16xbf16>, vector<16x128xbf16>, vector<128x128xf32> -> vector<128x128xf32>
    %3 = arith.truncf %2 : vector<128x128xf32> to vector<128x128xbf16>
    %cst_3 = arith.constant 0.000000e+00 : bf16
    %4 = vector.broadcast %cst_3 : bf16 to vector<128x128xbf16>
    %5 = arith.maximumf %3, %4 : vector<128x128xbf16>
    %c0_4 = arith.constant 0 : index
    %c0_5 = arith.constant 0 : index
    %6 = vector.load %arg3[%c0_4, %c0_5] : memref<128x128xbf16, #tpu.memory_space<vmem>>, vector<128x128xbf16>
    %cst_6 = arith.constant dense<0.000000e+00> : vector<128x128xf32>
    %7 = tpu.matmul %6, %5, %cst_6 {dimension_numbers = #tpu.dot_dimension_numbers<[1], [0], [0], [1], [0, 0, 1, 1], [], []>} : vector<128x128xbf16>, vector<128x128xbf16>, vector<128x128xf32> -> vector<128x128xf32>
    %8 = arith.truncf %7 : vector<128x128xf32> to vector<128x128xbf16>
    %cst_7 = arith.constant 0.000000e+00 : bf16
    %9 = vector.broadcast %cst_7 : bf16 to vector<128x128xbf16>
    %10 = arith.maximumf %8, %9 : vector<128x128xbf16>
    %c0_8 = arith.constant 0 : index
    %c0_9 = arith.constant 0 : index
    %11 = vector.load %arg4[%c0_8, %c0_9] : memref<128x128xbf16, #tpu.memory_space<vmem>>, vector<128x128xbf16>
    %cst_10 = arith.constant dense<0.000000e+00> : vector<128x128xf32>
    %12 = tpu.matmul %11, %10, %cst_10 {dimension_numbers = #tpu.dot_dimension_numbers<[1], [0], [0], [1], [0, 0, 1, 1], [], []>} : vector<128x128xbf16>, vector<128x128xbf16>, vector<128x128xf32> -> vector<128x128xf32>
    %13 = arith.truncf %12 : vector<128x128xf32> to vector<128x128xbf16>
    %cst_11 = arith.constant 0.000000e+00 : bf16
    %14 = vector.broadcast %cst_11 : bf16 to vector<128x128xbf16>
    %15 = arith.maximumf %13, %14 : vector<128x128xbf16>
    %c0_12 = arith.constant 0 : index
    %c0_13 = arith.constant 0 : index
    %16 = vector.load %arg5[%c0_12, %c0_13] : memref<8x128xbf16, #tpu.memory_space<vmem>>, vector<8x128xbf16>
    %cst_14 = arith.constant dense<0.000000e+00> : vector<8x128xf32>
    %17 = tpu.matmul %16, %15, %cst_14 {dimension_numbers = #tpu.dot_dimension_numbers<[1], [0], [0], [1], [0, 0, 1, 1], [], []>} : vector<8x128xbf16>, vector<128x128xbf16>, vector<8x128xf32> -> vector<8x128xf32>
    %c0_15 = arith.constant 0 : index
    %c0_16 = arith.constant 0 : index
    %18 = vector.load %arg6[%c0_15, %c0_16] : memref<8x1xf32, #tpu.memory_space<vmem>>, vector<8x1xf32>
    %19 = vector.broadcast %18 : vector<8x1xf32> to vector<8x128xf32>
    %20 = arith.addf %17, %19 : vector<8x128xf32>
    %c0_17 = arith.constant 0 : index
    %c0_18 = arith.constant 0 : index
    %21 = vector.load %arg7[%c0_17, %c0_18] : memref<8x128xf32, #tpu.memory_space<vmem>>, vector<8x128xf32>
    tpu.vector_store %arg7[%c0_17, %c0_18], %20 {strides = array<i32>} : memref<8x128xf32, #tpu.memory_space<vmem>>, vector<8x128xf32>,
    return
  }
  func.func @transform_0(%arg0: i32) -> (i32, i32) {
    %c0_i32 = arith.constant 0 : i32
    %c0_i32_0 = arith.constant 0 : i32
    return %c0_i32, %arg0 : i32, i32
  }
  func.func @transform_1(%arg0: i32) -> (i32, i32) {
    %c0_i32 = arith.constant 0 : i32
    %c0_i32_0 = arith.constant 0 : i32
    %c0_i32_1 = arith.constant 0 : i32
    return %c0_i32, %c0_i32_0 : i32, i32
  }
  func.func @transform_2(%arg0: i32) -> (i32, i32) {
    %c0_i32 = arith.constant 0 : i32
    %c0_i32_0 = arith.constant 0 : i32
    %c0_i32_1 = arith.constant 0 : i32
    return %c0_i32, %c0_i32_0 : i32, i32
  }
  func.func @transform_3(%arg0: i32) -> (i32, i32) {
    %c0_i32 = arith.constant 0 : i32
    %c0_i32_0 = arith.constant 0 : i32
    %c0_i32_1 = arith.constant 0 : i32
    return %c0_i32, %c0_i32_0 : i32, i32
  }
  func.func @transform_4(%arg0: i32) -> (i32, i32) {
    %c0_i32 = arith.constant 0 : i32
    %c0_i32_0 = arith.constant 0 : i32
    %c0_i32_1 = arith.constant 0 : i32
    return %c0_i32, %c0_i32_0 : i32, i32
  }
  func.func @transform_5(%arg0: i32) -> (i32, i32) {
    %c0_i32 = arith.constant 0 : i32
    %c0_i32_0 = arith.constant 0 : i32
    %c0_i32_1 = arith.constant 0 : i32
    return %c0_i32, %c0_i32_0 : i32, i32
  }
  func.func @transform_6(%arg0: i32) -> (i32, i32) {
    %c0_i32 = arith.constant 0 : i32
    %c0_i32_0 = arith.constant 0 : i32
    return %c0_i32, %arg0 : i32, i32
  }
}

</mosaic_0001>

<llo_original>
// kernel: tpu_custom_call.1
$region0: #{tpu_custom_call.1}
  #allocation0 [shape = 'u32[]', space=smem, size = 0x4, offset = 0x4, fixed_abs, tag = 'smem constant byte address 0x4 - core index']
  #allocation1 [shape = 'u32[144,128]{1,0:T(1,128)}', space=vmem, size = 0x12000, scoped, tag = 'internal scratch']
  %s0 = inlined_call_operand.vmem [shape: bf16[16,128], index: 0, kind: input, shape index: {}]
  %s1 = inlined_call_operand.vmem [shape: bf16[128,16], index: 1, kind: input, shape index: {}]
  %s2 = inlined_call_operand.vmem [shape: bf16[128,128], index: 2, kind: input, shape index: {}]
  %s3 = inlined_call_operand.hbm [shape: bf16[128,128], index: 3, kind: input, shape index: {}]
  %s4 = inlined_call_operand.vmem [shape: bf16[8,128], index: 4, kind: input, shape index: {}]
  %s5 = inlined_call_operand.vmem [shape: f32[8,1], index: 5, kind: input, shape index: {}]
  %s6 = inlined_call_operand.hbm [shape: f32[8,128], index: 6, kind: output, shape index: {}]
  %s7 = sld [smem:[#allocation0]]
  $region38: #{tpu_custom_call.1} parent=0
    _
  %s9 = ssub.s32 1, %s7
  %s10 = scalar_select 0, %s9, %s7
  $region1: #{tpu_custom_call.1} parent=0
    #allocation2 [shape = 'u8[32768]{0}', space=vmem, size = 0x8000, scoped, tag = 'input window, operand 3, single buffered']
    #allocation3 [shape = 's32[1]{0}', space=sflag, size = 0x4, scoped, tag = 'scoped memory for tpu_custom_call.1']
    #allocation4 [shape = 's32[1]{0}', space=sflag, size = 0x4, scoped, tag = 'scoped memory for tpu_custom_call.1']
    #allocation5 [shape = 'u8[4096]{0}', space=vmem, size = 0x1000, scoped, tag = 'output window, operand 0, single buffered']
    %11 = vsyncpa [#allocation3], 0
    %12 = vsyncpa [#allocation4], 0
    // Predicated region
    $region2: #{tpu_custom_call.1} parent=1 // pred_check
      _
    $region3: #{tpu_custom_call.1} parent=1 // pred_check_branch
      %14 = sbr.rel (0) target = $region5
    $region4: #{tpu_custom_call.1} parent=1 // pred_region
      _
    $region5: #{tpu_custom_call.1} parent=1 // pred_fallthru
      _
    // Predicated region
    $region6: #{tpu_custom_call.1} parent=1 // pred_check
      _
    $region7: #{tpu_custom_call.1} parent=1 // pred_check_branch
      %16 = sbr.rel (0) target = $region9
    $region8: #{tpu_custom_call.1} parent=1 // pred_region
      _
    $region9: #{tpu_custom_call.1} parent=1 // pred_fallthru
      _
    // Predicated region
    $region10: #{tpu_custom_call.1} parent=1 // pred_check
      _
    $region11: #{tpu_custom_call.1} parent=1 // pred_check_branch
      %18 = sbr.rel (0) target = $region13
    $region12: #{tpu_custom_call.1} parent=1 // pred_region
      _
    $region13: #{tpu_custom_call.1} parent=1 // pred_fallthru
      _
    // Predicated region
    $region14: #{tpu_custom_call.1} parent=1 // pred_check
      _
    $region15: #{tpu_custom_call.1} parent=1 // pred_check_branch
      %20 = sbr.rel (0) target = $region17
    $region16: #{tpu_custom_call.1} parent=1 // pred_region
      %s22 = ssub.s32 1024, 1024
      %23 = vsyncadd [#allocation3], %s22
      %s24 = sshll.u32 [#allocation2], 4
      %s25 = int_to_ptr.vmem [resolvable:$true] %s24
      %30 = dma.hbm_to_vmem [thread:$0]  %s3, 1024, %s25, [#allocation3], 64, 64, 4
    $region17: #{tpu_custom_call.1} parent=1 // pred_fallthru
      _
    // Predicated region
    $region18: #{tpu_custom_call.1} parent=1 // pred_check
      _
    $region19: #{tpu_custom_call.1} parent=1 // pred_check_branch
      %32 = sbr.rel (0) target = $region21
    $region20: #{tpu_custom_call.1} parent=1 // pred_region
      _
    $region21: #{tpu_custom_call.1} parent=1 // pred_fallthru
      _
    // Predicated region
    $region22: #{tpu_custom_call.1} parent=1 // pred_check
      _
    $region23: #{tpu_custom_call.1} parent=1 // pred_check_branch
      %34 = sbr.rel (0) target = $region25
    $region24: #{tpu_custom_call.1} parent=1 // pred_region
      _
    $region25: #{tpu_custom_call.1} parent=1 // pred_fallthru
      _
    // Predicated region
    $region26: #{tpu_custom_call.1} parent=1 // pred_check
      _
    $region27: #{tpu_custom_call.1} parent=1 // pred_check_branch
      %36 = sbr.rel (0) target = $region29
    $region28: #{tpu_custom_call.1} parent=1 // pred_region
      %37 = dma.done [#allocation3], 1024
    $region29: #{tpu_custom_call.1} parent=1 // pred_fallthru
      _
    %v39 = vld [vmem:[%s1] sm:$0xf]
    %v40 = vld [vmem:[%s1 + $0x4] sm:$0xf]
    %v41 = vld [vmem:[%s1 + $0x8] sm:$0xf]
    %v42 = vld [vmem:[%s1 + $0xc] sm:$0xf]
    %v43 = vld [vmem:[%s1 + $0x10] sm:$0xf]
    %v44 = vld [vmem:[%s1 + $0x14] sm:$0xf]
    %v45 = vld [vmem:[%s1 + $0x18] sm:$0xf]
    %v46 = vld [vmem:[%s1 + $0x1c] sm:$0xf]
    %v47 = vld [vmem:[%s1 + $0x20] sm:$0xf]
    %v48 = vld [vmem:[%s1 + $0x24] sm:$0xf]
    %v49 = vld [vmem:[%s1 + $0x28] sm:$0xf]
    %v50 = vld [vmem:[%s1 + $0x2c] sm:$0xf]
    %v51 = vld [vmem:[%s1 + $0x30] sm:$0xf]
    %v52 = vld [vmem:[%s1 + $0x34] sm:$0xf]
    %v53 = vld [vmem:[%s1 + $0x38] sm:$0xf]
    %v54 = vld [vmem:[%s1 + $0x3c] sm:$0xf]
    %v55 = vld [vmem:[%s0] sm:$0xf]
    %v56 = vld [vmem:[%s0 + $0x4] sm:$0xf]
    %v73 = vunpack.c.l.b16 %v39
    %v74 = vunpack.c.l.b16 %v40
    %v75 = vunpack.c.l.b16 %v41
    %v76 = vunpack.c.l.b16 %v42
    %v77 = vunpack.c.l.b16 %v43
    %v78 = vunpack.c.l.b16 %v44
    %v79 = vunpack.c.l.b16 %v45
    %v80 = vunpack.c.l.b16 %v46
    %v81 = vunpack.c.l.b16 %v47
    %v82 = vunpack.c.l.b16 %v48
    %v83 = vunpack.c.l.b16 %v49
    %v84 = vunpack.c.l.b16 %v50
    %v85 = vunpack.c.l.b16 %v51
    %v86 = vunpack.c.l.b16 %v52
    %v87 = vunpack.c.l.b16 %v53
    %v88 = vunpack.c.l.b16 %v54
    %v89 = vpack.c.b16 %v74, %v73
    %v90 = vpack.c.b16 %v76, %v75
    %v91 = vpack.c.b16 %v78, %v77
    %v92 = vpack.c.b16 %v80, %v79
    %v93 = vpack.c.b16 %v82, %v81
    %v94 = vpack.c.b16 %v84, %v83
    %v95 = vpack.c.b16 %v86, %v85
    %v96 = vpack.c.b16 %v88, %v87
    %v99 = vunpack.c.l.b16 %v55
    %v100 = vunpack.c.l.b16 %v56
    %v101 = vpack.c.b16 %v100, %v99
    %vm103 = vcmask 130048
    %v105 = vsel %vm103, %v89, 0
    %v108 = vsel %vm103, %v90, 0
    %v111 = vsel %vm103, %v91, 0
    %v114 = vsel %vm103, %v92, 0
    %v117 = vsel %vm103, %v93, 0
    %v120 = vsel %vm103, %v94, 0
    %v123 = vsel %vm103, %v95, 0
    %v126 = vsel %vm103, %v96, 0
    %128 = vmatprep.subr.bf16.mxu0 0
    %129 = vmatpush1.bf16.msra.mxu0 %v101
    %130 = vmatprep.subr.bf16.mxu0 0
    %131 = vmatpush1.bf16.msra.mxu0 0
    %132 = vmatprep.subr.bf16.mxu0 0
    %133 = vmatpush1.bf16.msra.mxu0 0
    %134 = vmatprep.subr.bf16.mxu0 0
    %135 = vmatpush1.bf16.msra.mxu0 0
    %136 = vmatprep.subr.bf16.mxu0 0
    %137 = vmatpush1.bf16.msra.mxu0 0
    %138 = vmatprep.subr.bf16.mxu0 0
    %139 = vmatpush1.bf16.msra.mxu0 0
    %140 = vmatprep.subr.bf16.mxu0 0
    %141 = vmatpush1.bf16.msra.mxu0 0
    %142 = vmatprep.subr.bf16.mxu0 0
    %143 = vmatpush1.bf16.msra.mxu0 0
    %144 = vmatprep.subr.bf16.mxu0 0
    %145 = vmatpush1.bf16.msra.mxu0 0
    %146 = vmatprep.subr.bf16.mxu0 0
    %147 = vmatpush1.bf16.msra.mxu0 0
    %148 = vmatprep.subr.bf16.mxu0 0
    %149 = vmatpush1.bf16.msra.mxu0 0
    %150 = vmatprep.subr.bf16.mxu0 0
    %151 = vmatpush1.bf16.msra.mxu0 0
    %152 = vmatprep.subr.bf16.mxu0 0
    %153 = vmatpush1.bf16.msra.mxu0 0
    %154 = vmatprep.subr.bf16.mxu0 0
    %155 = vmatpush1.bf16.msra.mxu0 0
    %156 = vmatprep.subr.bf16.mxu0 0
    %157 = vmatpush1.bf16.msra.mxu0 0
    %158 = vmatprep.subr.bf16.mxu0 0
    %159 = vmatpush1.bf16.msra.mxu0 0
    %160 = vmatprep.mubr.bf16.mxu0 0
    %161 = vmatmul.mubr.bf16.gmra.mrb[0].mxu0 %v105
    %v162 = vpop.f32.mrb[0].mxu0
    %v163 = vadd.f32 0.0, %v162
    %v164 = vpop.f32.mrb[0].mxu0
    %v165 = vpop.f32.mrb[0].mxu0
    %v166 = vadd.f32 0.0, %v165
    %v167 = vpop.f32.mrb[0].mxu0
    %168 = vmatprep.mubr.bf16.mxu0 0
    %169 = vmatmul.mubr.bf16.gmra.mrb[0].mxu0 %v108
    %v170 = vpop.f32.mrb[0].mxu0
    %v171 = vadd.f32 0.0, %v170
    %v172 = vpop.f32.mrb[0].mxu0
    %v173 = vpop.f32.mrb[0].mxu0
    %v174 = vadd.f32 0.0, %v173
    %v175 = vpop.f32.mrb[0].mxu0
    %176 = vmatprep.mubr.bf16.mxu0 0
    %177 = vmatmul.mubr.bf16.gmra.mrb[0].mxu0 %v111
    %v178 = vpop.f32.mrb[0].mxu0
    %v179 = vadd.f32 0.0, %v178
    %v180 = vpop.f32.mrb[0].mxu0
    %v181 = vpop.f32.mrb[0].mxu0
    %v182 = vadd.f32 0.0, %v181
    %v183 = vpop.f32.mrb[0].mxu0
    %184 = vmatprep.mubr.bf16.mxu0 0
    %185 = vmatmul.mubr.bf16.gmra.mrb[0].mxu0 %v114
    %v186 = vpop.f32.mrb[0].mxu0
    %v187 = vadd.f32 0.0, %v186
    %v188 = vpop.f32.mrb[0].mxu0
    %v189 = vpop.f32.mrb[0].mxu0
    %v190 = vadd.f32 0.0, %v189
    %v191 = vpop.f32.mrb[0].mxu0
    %192 = vmatprep.mubr.bf16.mxu0 0
    %193 = vmatmul.mubr.bf16.gmra.mrb[0].mxu0 %v117
    %v194 = vpop.f32.mrb[0].mxu0
    %v195 = vadd.f32 0.0, %v194
    %v196 = vpop.f32.mrb[0].mxu0
    %v197 = vpop.f32.mrb[0].mxu0
    %v198 = vadd.f32 0.0, %v197
    %v199 = vpop.f32.mrb[0].mxu0
    %200 = vmatprep.mubr.bf16.mxu0 0
    %201 = vmatmul.mubr.bf16.gmra.mrb[0].mxu0 %v120
    %v202 = vpop.f32.mrb[0].mxu0
    %v203 = vadd.f32 0.0, %v202
    %v204 = vpop.f32.mrb[0].mxu0
    %v205 = vpop.f32.mrb[0].mxu0
    %v206 = vadd.f32 0.0, %v205
    %v207 = vpop.f32.mrb[0].mxu0
    %208 = vmatprep.mubr.bf16.mxu0 0
    %209 = vmatmul.mubr.bf16.gmra.mrb[0].mxu0 %v123
    %v210 = vpop.f32.mrb[0].mxu0
    %v211 = vadd.f32 0.0, %v210
    %v212 = vpop.f32.mrb[0].mxu0
    %v213 = vpop.f32.mrb[0].mxu0
    %v214 = vadd.f32 0.0, %v213
    %v215 = vpop.f32.mrb[0].mxu0
    %216 = vmatprep.mubr.bf16.mxu0 0
    %217 = vmatmul.mubr.bf16.gmra.mrb[0].mxu0 %v126
    %v218 = vpop.f32.mrb[0].mxu0
    %v219 = vadd.f32 0.0, %v218
    %v220 = vpop.f32.mrb[0].mxu0
    %v221 = vpop.f32.mrb[0].mxu0
    %v222 = vadd.f32 0.0, %v221
    %v223 = vpop.f32.mrb[0].mxu0
    %224 = vdwg.mxu0
    %v225 = vpack.c.bf16 %v166, %v163
    %v226 = vpack.c.bf16 %v174, %v171
    %v227 = vpack.c.bf16 %v182, %v179
    %v228 = vpack.c.bf16 %v190, %v187
    %v229 = vpack.c.bf16 %v198, %v195
    %v230 = vpack.c.bf16 %v206, %v203
    %v231 = vpack.c.bf16 %v214, %v211
    %v232 = vpack.c.bf16 %v222, %v219
    %v233 = vmax.bf16 %v225, 0
    %v234 = vmax.bf16 %v226, 0
    %v235 = vmax.bf16 %v227, 0
    %v236 = vmax.bf16 %v228, 0
    %v237 = vmax.bf16 %v229, 0
    %v238 = vmax.bf16 %v230, 0
    %v239 = vmax.bf16 %v231, 0
    %v240 = vmax.bf16 %v232, 0
    %v241 = vld [vmem:[%s2] sm:$0xf]
    %v242 = vld [vmem:[%s2 + $0x4] sm:$0xf]
    %v243 = vld [vmem:[%s2 + $0x8] sm:$0xf]
    %v244 = vld [vmem:[%s2 + $0xc] sm:$0xf]
    %v245 = vld [vmem:[%s2 + $0x10] sm:$0xf]
    %v246 = vld [vmem:[%s2 + $0x14] sm:$0xf]
    %v247 = vld [vmem:[%s2 + $0x18] sm:$0xf]
    %v248 = vld [vmem:[%s2 + $0x1c] sm:$0xf]
    %v249 = vld [vmem:[%s2 + $0x20] sm:$0xf]
    %v250 = vld [vmem:[%s2 + $0x24] sm:$0xf]
    %v251 = vld [vmem:[%s2 + $0x28] sm:$0xf]
    %v252 = vld [vmem:[%s2 + $0x2c] sm:$0xf]
    %v253 = vld [vmem:[%s2 + $0x30] sm:$0xf]
    %v254 = vld [vmem:[%s2 + $0x34] sm:$0xf]
    %v255 = vld [vmem:[%s2 + $0x38] sm:$0xf]
    %v256 = vld [vmem:[%s2 + $0x3c] sm:$0xf]
    %v273 = vunpack.c.l.b16 %v241
    %v274 = vunpack.c.l.b16 %v242
    %v275 = vunpack.c.l.b16 %v243
    %v276 = vunpack.c.l.b16 %v244
    %v277 = vunpack.c.l.b16 %v245
    %v278 = vunpack.c.l.b16 %v246
    %v279 = vunpack.c.l.b16 %v247
    %v280 = vunpack.c.l.b16 %v248
    %v281 = vunpack.c.l.b16 %v249
    %v282 = vunpack.c.l.b16 %v250
    %v283 = vunpack.c.l.b16 %v251
    %v284 = vunpack.c.l.b16 %v252
    %v285 = vunpack.c.l.b16 %v253
    %v286 = vunpack.c.l.b16 %v254
    %v287 = vunpack.c.l.b16 %v255
    %v288 = vunpack.c.l.b16 %v256
    %v289 = vpack.c.b16 %v274, %v273
    %v290 = vpack.c.b16 %v276, %v275
    %v291 = vpack.c.b16 %v278, %v277
    %v292 = vpack.c.b16 %v280, %v279
    %v293 = vpack.c.b16 %v282, %v281
    %v294 = vpack.c.b16 %v284, %v283
    %v295 = vpack.c.b16 %v286, %v285
    %v296 = vpack.c.b16 %v288, %v287
    %305 = vmatprep.subr.bf16.mxu0 0
    %306 = vmatpush1.bf16.msra.mxu0 %v233
    %307 = vmatprep.subr.bf16.mxu0 0
    %308 = vmatpush1.bf16.msra.mxu0 %v234
    %309 = vmatprep.subr.bf16.mxu0 0
    %310 = vmatpush1.bf16.msra.mxu0 %v235
    %311 = vmatprep.subr.bf16.mxu0 0
    %312 = vmatpush1.bf16.msra.mxu0 %v236
    %313 = vmatprep.subr.bf16.mxu0 0
    %314 = vmatpush1.bf16.msra.mxu0 %v237
    %315 = vmatprep.subr.bf16.mxu0 0
    %316 = vmatpush1.bf16.msra.mxu0 %v238
    %317 = vmatprep.subr.bf16.mxu0 0
    %318 = vmatpush1.bf16.msra.mxu0 %v239
    %319 = vmatprep.subr.bf16.mxu0 0
    %320 = vmatpush1.bf16.msra.mxu0 %v240
    %321 = vmatprep.subr.bf16.mxu0 0
    %322 = vmatpush1.bf16.msra.mxu0 0
    %323 = vmatprep.subr.bf16.mxu0 0
    %324 = vmatpush1.bf16.msra.mxu0 0
    %325 = vmatprep.subr.bf16.mxu0 0
    %326 = vmatpush1.bf16.msra.mxu0 0
    %327 = vmatprep.subr.bf16.mxu0 0
    %328 = vmatpush1.bf16.msra.mxu0 0
    %329 = vmatprep.subr.bf16.mxu0 0
    %330 = vmatpush1.bf16.msra.mxu0 0
    %331 = vmatprep.subr.bf16.mxu0 0
    %332 = vmatpush1.bf16.msra.mxu0 0
    %333 = vmatprep.subr.bf16.mxu0 0
    %334 = vmatpush1.bf16.msra.mxu0 0
    %335 = vmatprep.subr.bf16.mxu0 0
    %336 = vmatpush1.bf16.msra.mxu0 0
    %337 = vmatprep.mubr.bf16.mxu0 0
    %338 = vmatmul.mubr.bf16.gmra.mrb[0].mxu0 %v289
    %v339 = vpop.f32.mrb[0].mxu0
    %v340 = vadd.f32 0.0, %v339
    %v341 = vpop.f32.mrb[0].mxu0
    %v342 = vpop.f32.mrb[0].mxu0
    %v343 = vadd.f32 0.0, %v342
    %v344 = vpop.f32.mrb[0].mxu0
    %345 = vmatprep.mubr.bf16.mxu0 0
    %346 = vmatmul.mubr.bf16.gmra.mrb[0].mxu0 %v290
    %v347 = vpop.f32.mrb[0].mxu0
    %v348 = vadd.f32 0.0, %v347
    %v349 = vpop.f32.mrb[0].mxu0
    %v350 = vpop.f32.mrb[0].mxu0
    %v351 = vadd.f32 0.0, %v350
    %v352 = vpop.f32.mrb[0].mxu0
    %353 = vmatprep.mubr.bf16.mxu0 0
    %354 = vmatmul.mubr.bf16.gmra.mrb[0].mxu0 %v291
    %v355 = vpop.f32.mrb[0].mxu0
    %v356 = vadd.f32 0.0, %v355
    %v357 = vpop.f32.mrb[0].mxu0
    %v358 = vpop.f32.mrb[0].mxu0
    %v359 = vadd.f32 0.0, %v358
    %v360 = vpop.f32.mrb[0].mxu0
    %361 = vmatprep.mubr.bf16.mxu0 0
    %362 = vmatmul.mubr.bf16.gmra.mrb[0].mxu0 %v292
    %v363 = vpop.f32.mrb[0].mxu0
    %v364 = vadd.f32 0.0, %v363
    %v365 = vpop.f32.mrb[0].mxu0
    %v366 = vpop.f32.mrb[0].mxu0
    %v367 = vadd.f32 0.0, %v366
    %v368 = vpop.f32.mrb[0].mxu0
    %369 = vmatprep.mubr.bf16.mxu0 0
    %370 = vmatmul.mubr.bf16.gmra.mrb[0].mxu0 %v293
    %v371 = vpop.f32.mrb[0].mxu0
    %v372 = vadd.f32 0.0, %v371
    %v373 = vpop.f32.mrb[0].mxu0
    %v374 = vpop.f32.mrb[0].mxu0
    %v375 = vadd.f32 0.0, %v374
    %v376 = vpop.f32.mrb[0].mxu0
    %377 = vmatprep.mubr.bf16.mxu0 0
    %378 = vmatmul.mubr.bf16.gmra.mrb[0].mxu0 %v294
    %v379 = vpop.f32.mrb[0].mxu0
    %v380 = vadd.f32 0.0, %v379
    %v381 = vpop.f32.mrb[0].mxu0
    %v382 = vpop.f32.mrb[0].mxu0
    %v383 = vadd.f32 0.0, %v382
    %v384 = vpop.f32.mrb[0].mxu0
    %385 = vmatprep.mubr.bf16.mxu0 0
    %386 = vmatmul.mubr.bf16.gmra.mrb[0].mxu0 %v295
    %v387 = vpop.f32.mrb[0].mxu0
    %v388 = vadd.f32 0.0, %v387
    %v389 = vpop.f32.mrb[0].mxu0
    %v390 = vpop.f32.mrb[0].mxu0
    %v391 = vadd.f32 0.0, %v390
    %v392 = vpop.f32.mrb[0].mxu0
    %393 = vmatprep.mubr.bf16.mxu0 0
    %394 = vmatmul.mubr.bf16.gmra.mrb[0].mxu0 %v296
    %v395 = vpop.f32.mrb[0].mxu0
    %v396 = vadd.f32 0.0, %v395
    %v397 = vpop.f32.mrb[0].mxu0
    %v398 = vpop.f32.mrb[0].mxu0
    %v399 = vadd.f32 0.0, %v398
    %v400 = vpop.f32.mrb[0].mxu0
    %401 = vdwg.mxu0
    %v402 = vpack.c.bf16 %v343, %v340
    %v403 = vpack.c.bf16 %v351, %v348
    %v404 = vpack.c.bf16 %v359, %v356
    %v405 = vpack.c.bf16 %v367, %v364
    %v406 = vpack.c.bf16 %v375, %v372
    %v407 = vpack.c.bf16 %v383, %v380
    %v408 = vpack.c.bf16 %v391, %v388
    %v409 = vpack.c.bf16 %v399, %v396
    %v410 = vmax.bf16 %v402, 0
    %v411 = vmax.bf16 %v403, 0
    %v412 = vmax.bf16 %v404, 0
    %v413 = vmax.bf16 %v405, 0
    %v414 = vmax.bf16 %v406, 0
    %v415 = vmax.bf16 %v407, 0
    %v416 = vmax.bf16 %v408, 0
    %v417 = vmax.bf16 %v409, 0
    %v418 = vld [vmem:[#allocation2] sm:$0xf]
    %v419 = vld [vmem:[#allocation2 + $0x4] sm:$0xf]
    %v420 = vld [vmem:[#allocation2 + $0x8] sm:$0xf]
    %v421 = vld [vmem:[#allocation2 + $0xc] sm:$0xf]
    %v422 = vld [vmem:[#allocation2 + $0x10] sm:$0xf]
    %v423 = vld [vmem:[#allocation2 + $0x14] sm:$0xf]
    %v424 = vld [vmem:[#allocation2 + $0x18] sm:$0xf]
    %v425 = vld [vmem:[#allocation2 + $0x1c] sm:$0xf]
    %v426 = vld [vmem:[#allocation2 + $0x20] sm:$0xf]
    %v427 = vld [vmem:[#allocation2 + $0x24] sm:$0xf]
    %v428 = vld [vmem:[#allocation2 + $0x28] sm:$0xf]
    %v429 = vld [vmem:[#allocation2 + $0x2c] sm:$0xf]
    %v430 = vld [vmem:[#allocation2 + $0x30] sm:$0xf]
    %v431 = vld [vmem:[#allocation2 + $0x34] sm:$0xf]
    %v432 = vld [vmem:[#allocation2 + $0x38] sm:$0xf]
    %v433 = vld [vmem:[#allocation2 + $0x3c] sm:$0xf]
    %v450 = vunpack.c.l.b16 %v418
    %v451 = vunpack.c.l.b16 %v419
    %v452 = vunpack.c.l.b16 %v420
    %v453 = vunpack.c.l.b16 %v421
    %v454 = vunpack.c.l.b16 %v422
    %v455 = vunpack.c.l.b16 %v423
    %v456 = vunpack.c.l.b16 %v424
    %v457 = vunpack.c.l.b16 %v425
    %v458 = vunpack.c.l.b16 %v426
    %v459 = vunpack.c.l.b16 %v427
    %v460 = vunpack.c.l.b16 %v428
    %v461 = vunpack.c.l.b16 %v429
    %v462 = vunpack.c.l.b16 %v430
    %v463 = vunpack.c.l.b16 %v431
    %v464 = vunpack.c.l.b16 %v432
    %v465 = vunpack.c.l.b16 %v433
    %v466 = vpack.c.b16 %v451, %v450
    %v467 = vpack.c.b16 %v453, %v452
    %v468 = vpack.c.b16 %v455, %v454
    %v469 = vpack.c.b16 %v457, %v456
    %v470 = vpack.c.b16 %v459, %v458
    %v471 = vpack.c.b16 %v461, %v460
    %v472 = vpack.c.b16 %v463, %v462
    %v473 = vpack.c.b16 %v465, %v464
    %482 = vmatprep.subr.bf16.mxu0 0
    %483 = vmatpush1.bf16.msra.mxu0 %v410
    %484 = vmatprep.subr.bf16.mxu0 0
    %485 = vmatpush1.bf16.msra.mxu0 %v411
    %486 = vmatprep.subr.bf16.mxu0 0
    %487 = vmatpush1.bf16.msra.mxu0 %v412
    %488 = vmatprep.subr.bf16.mxu0 0
    %489 = vmatpush1.bf16.msra.mxu0 %v413
    %490 = vmatprep.subr.bf16.mxu0 0
    %491 = vmatpush1.bf16.msra.mxu0 %v414
    %492 = vmatprep.subr.bf16.mxu0 0
    %493 = vmatpush1.bf16.msra.mxu0 %v415
    %494 = vmatprep.subr.bf16.mxu0 0
    %495 = vmatpush1.bf16.msra.mxu0 %v416
    %496 = vmatprep.subr.bf16.mxu0 0
    %497 = vmatpush1.bf16.msra.mxu0 %v417
    %498 = vmatprep.subr.bf16.mxu0 0
    %499 = vmatpush1.bf16.msra.mxu0 0
    %500 = vmatprep.subr.bf16.mxu0 0
    %501 = vmatpush1.bf16.msra.mxu0 0
    %502 = vmatprep.subr.bf16.mxu0 0
    %503 = vmatpush1.bf16.msra.mxu0 0
    %504 = vmatprep.subr.bf16.mxu0 0
    %505 = vmatpush1.bf16.msra.mxu0 0
    %506 = vmatprep.subr.bf16.mxu0 0
    %507 = vmatpush1.bf16.msra.mxu0 0
    %508 = vmatprep.subr.bf16.mxu0 0
    %509 = vmatpush1.bf16.msra.mxu0 0
    %510 = vmatprep.subr.bf16.mxu0 0
    %511 = vmatpush1.bf16.msra.mxu0 0
    %512 = vmatprep.subr.bf16.mxu0 0
    %513 = vmatpush1.bf16.msra.mxu0 0
    %514 = vmatprep.mubr.bf16.mxu0 0
    %515 = vmatmul.mubr.bf16.gmra.mrb[0].mxu0 %v466
    %v516 = vpop.f32.mrb[0].mxu0
    %v517 = vadd.f32 0.0, %v516
    %v518 = vpop.f32.mrb[0].mxu0
    %v519 = vpop.f32.mrb[0].mxu0
    %v520 = vadd.f32 0.0, %v519
    %v521 = vpop.f32.mrb[0].mxu0
    %522 = vmatprep.mubr.bf16.mxu0 0
    %523 = vmatmul.mubr.bf16.gmra.mrb[0].mxu0 %v467
    %v524 = vpop.f32.mrb[0].mxu0
    %v525 = vadd.f32 0.0, %v524
    %v526 = vpop.f32.mrb[0].mxu0
    %v527 = vpop.f32.mrb[0].mxu0
    %v528 = vadd.f32 0.0, %v527
    %v529 = vpop.f32.mrb[0].mxu0
    %530 = vmatprep.mubr.bf16.mxu0 0
    %531 = vmatmul.mubr.bf16.gmra.mrb[0].mxu0 %v468
    %v532 = vpop.f32.mrb[0].mxu0
    %v533 = vadd.f32 0.0, %v532
    %v534 = vpop.f32.mrb[0].mxu0
    %v535 = vpop.f32.mrb[0].mxu0
    %v536 = vadd.f32 0.0, %v535
    %v537 = vpop.f32.mrb[0].mxu0
    %538 = vmatprep.mubr.bf16.mxu0 0
    %539 = vmatmul.mubr.bf16.gmra.mrb[0].mxu0 %v469
    %v540 = vpop.f32.mrb[0].mxu0
    %v541 = vadd.f32 0.0, %v540
    %v542 = vpop.f32.mrb[0].mxu0
    %v543 = vpop.f32.mrb[0].mxu0
    %v544 = vadd.f32 0.0, %v543
    %v545 = vpop.f32.mrb[0].mxu0
    %546 = vmatprep.mubr.bf16.mxu0 0
    %547 = vmatmul.mubr.bf16.gmra.mrb[0].mxu0 %v470
    %v548 = vpop.f32.mrb[0].mxu0
    %v549 = vadd.f32 0.0, %v548
    %v550 = vpop.f32.mrb[0].mxu0
    %v551 = vpop.f32.mrb[0].mxu0
    %v552 = vadd.f32 0.0, %v551
    %v553 = vpop.f32.mrb[0].mxu0
    %554 = vmatprep.mubr.bf16.mxu0 0
    %555 = vmatmul.mubr.bf16.gmra.mrb[0].mxu0 %v471
    %v556 = vpop.f32.mrb[0].mxu0
    %v557 = vadd.f32 0.0, %v556
    %v558 = vpop.f32.mrb[0].mxu0
    %v559 = vpop.f32.mrb[0].mxu0
    %v560 = vadd.f32 0.0, %v559
    %v561 = vpop.f32.mrb[0].mxu0
    %562 = vmatprep.mubr.bf16.mxu0 0
    %563 = vmatmul.mubr.bf16.gmra.mrb[0].mxu0 %v472
    %v564 = vpop.f32.mrb[0].mxu0
    %v565 = vadd.f32 0.0, %v564
    %v566 = vpop.f32.mrb[0].mxu0
    %v567 = vpop.f32.mrb[0].mxu0
    %v568 = vadd.f32 0.0, %v567
    %v569 = vpop.f32.mrb[0].mxu0
    %570 = vmatprep.mubr.bf16.mxu0 0
    %571 = vmatmul.mubr.bf16.gmra.mrb[0].mxu0 %v473
    %v572 = vpop.f32.mrb[0].mxu0
    %v573 = vadd.f32 0.0, %v572
    %v574 = vpop.f32.mrb[0].mxu0
    %v575 = vpop.f32.mrb[0].mxu0
    %v576 = vadd.f32 0.0, %v575
    %v577 = vpop.f32.mrb[0].mxu0
    %578 = vdwg.mxu0
    %v579 = vpack.c.bf16 %v520, %v517
    %v580 = vpack.c.bf16 %v528, %v525
    %v581 = vpack.c.bf16 %v536, %v533
    %v582 = vpack.c.bf16 %v544, %v541
    %v583 = vpack.c.bf16 %v552, %v549
    %v584 = vpack.c.bf16 %v560, %v557
    %v585 = vpack.c.bf16 %v568, %v565
    %v586 = vpack.c.bf16 %v576, %v573
    %v587 = vmax.bf16 %v579, 0
    %v588 = vmax.bf16 %v580, 0
    %v589 = vmax.bf16 %v581, 0
    %v590 = vmax.bf16 %v582, 0
    %v591 = vmax.bf16 %v583, 0
    %v592 = vmax.bf16 %v584, 0
    %v593 = vmax.bf16 %v585, 0
    %v594 = vmax.bf16 %v586, 0
    %v595 = vld [vmem:[%s4] sm:$0xf]
    %v596 = vld [vmem:[%s5] sm:$0xff]
    %598 = vset.pattern.permute.xlu0 0
    %599 = vperm.xlu0 %598, %v596
    %v600 = vpop.permute.xlu0 %599
    %602 = vmatprep.subr.bf16.mxu0 0
    %603 = vmatpush1.bf16.msra.mxu0 %v587
    %604 = vmatprep.subr.bf16.mxu0 0
    %605 = vmatpush1.bf16.msra.mxu0 %v588
    %606 = vmatprep.subr.bf16.mxu0 0
    %607 = vmatpush1.bf16.msra.mxu0 %v589
    %608 = vmatprep.subr.bf16.mxu0 0
    %609 = vmatpush1.bf16.msra.mxu0 %v590
    %610 = vmatprep.subr.bf16.mxu0 0
    %611 = vmatpush1.bf16.msra.mxu0 %v591
    %612 = vmatprep.subr.bf16.mxu0 0
    %613 = vmatpush1.bf16.msra.mxu0 %v592
    %614 = vmatprep.subr.bf16.mxu0 0
    %615 = vmatpush1.bf16.msra.mxu0 %v593
    %616 = vmatprep.subr.bf16.mxu0 0
    %617 = vmatpush1.bf16.msra.mxu0 %v594
    %618 = vmatprep.subr.bf16.mxu0 0
    %619 = vmatpush1.bf16.msra.mxu0 0
    %620 = vmatprep.subr.bf16.mxu0 0
    %621 = vmatpush1.bf16.msra.mxu0 0
    %622 = vmatprep.subr.bf16.mxu0 0
    %623 = vmatpush1.bf16.msra.mxu0 0
    %624 = vmatprep.subr.bf16.mxu0 0
    %625 = vmatpush1.bf16.msra.mxu0 0
    %626 = vmatprep.subr.bf16.mxu0 0
    %627 = vmatpush1.bf16.msra.mxu0 0
    %628 = vmatprep.subr.bf16.mxu0 0
    %629 = vmatpush1.bf16.msra.mxu0 0
    %630 = vmatprep.subr.bf16.mxu0 0
    %631 = vmatpush1.bf16.msra.mxu0 0
    %632 = vmatprep.subr.bf16.mxu0 0
    %633 = vmatpush1.bf16.msra.mxu0 0
    %634 = vmatprep.mubr.bf16.mxu0 0
    %635 = vmatmul.mubr.bf16.gmra.mrb[0].mxu0 %v595
    %v636 = vpop.f32.mrb[0].mxu0
    %v637 = vadd.f32 %v600, %v636
    %v638 = vpop.f32.mrb[0].mxu0
    %v639 = vpop.f32.mrb[0].mxu0
    %v640 = vpop.f32.mrb[0].mxu0
    %641 = vdwg.mxu0
    %642 = vst [vmem:[#allocation5] sm:$0xff] %v637
    // Predicated region
    $region30: #{tpu_custom_call.1} parent=1 // pred_check
      _
    $region31: #{tpu_custom_call.1} parent=1 // pred_check_branch
      %644 = sbr.rel (0) target = $region33
    $region32: #{tpu_custom_call.1} parent=1 // pred_region
      %s646 = ssub.s32 128, 128
      %647 = vsyncadd [#allocation4], %s646
      %s649 = sshll.u32 [#allocation5], 4
      %s650 = int_to_ptr.vmem [resolvable:$true] %s649
      %652 = dma.vmem_to_hbm [thread:$0]  %s650, 128, %s6, [#allocation4]
    $region33: #{tpu_custom_call.1} parent=1 // pred_fallthru
      _
    // Predicated region
    $region34: #{tpu_custom_call.1} parent=1 // pred_check
      _
    $region35: #{tpu_custom_call.1} parent=1 // pred_check_branch
      %654 = sbr.rel (0) target = $region37
    $region36: #{tpu_custom_call.1} parent=1 // pred_region
      %655 = dma.done [#allocation4], 128
    $region37: #{tpu_custom_call.1} parent=1 // pred_fallthru
      _
    %656 = vsyncpa [#allocation3], 1
    %657 = vsyncpa [#allocation4], 1

</llo_original>
